<compile_context>
chip_gen: v7x
topology: tpu7x:2x2x1
jax: 0.10.0
libtpu: 0.0.40
codegen_flags: <defaults>
</compile_context>

<pallas_src>
import functools

import jax
import jax.numpy as jnp
from jax.experimental import pallas as pl
from jax.experimental.pallas import tpu as pltpu

LANE = 128      # TPU lane width
SUBLANE = 8     # f32 sublane width


def _round_up(x: int, m: int) -> int:
    return (x + m - 1) // m * m


def _make_mlp_kernel(num_layers: int):
    """Build a kernel for `num_layers` Linear layers (ReLU between all but the
    last).  The module's x10 on the last column is already folded into the last
    layer's parameters, so the body is plain matmul + bias (+ ReLU) with f32
    MXU accumulation and a direct (tb, out_dim) store."""

    def kernel(x_ref, *rest):
        o_ref = rest[-1]
        h = x_ref[...]
        for li in range(num_layers):
            w = rest[2 * li][...]
            b = rest[2 * li + 1][...]
            h = jnp.dot(h, w, preferred_element_type=jnp.float32) + b
            if li < num_layers - 1:
                h = jnp.maximum(h, 0.0)
        o_ref[...] = h.astype(o_ref.dtype)

    return kernel


def prepare_params(params):
    """One-time host-side parameter prep (call once, outside the hot path):
      - fold the module's `x[:, -1] *= 10` into the last layer's w[:, -1]/b[-1];
      - reshape biases to (1, N) rows for in-kernel broadcasting.
    `params` is a list of (w, b) per layer, w pre-transposed as [in, out]."""
    weights, biases = [], []
    n = len(params)
    for li, (w, b) in enumerate(params):
        w = jnp.asarray(w, jnp.float32)
        b = jnp.asarray(b, jnp.float32)
        if li == n - 1:
            w = w.at[:, -1].multiply(10.0)
            b = b.at[-1].multiply(10.0)
        weights.append(w)
        biases.append(b.reshape(1, -1))
    return {"weights": weights, "biases": biases}


def _pick_batch_tile(B: int, block_b: int):
    """Pick (tb, b_pad).  Prefers: no batch padding (tb | B), tb a multiple of
    the f32 sublane (8), >= 2 grid steps when B is non-trivial (keeps both
    TensorCores busy on v7x), and tb as large as possible (<= block_b)."""
    if B <= 2 * SUBLANE:
        return B, B                      # tiny batch: single full-extent block
    cap = min(block_b, B // 2)
    cap = (cap // SUBLANE) * SUBLANE
    d = cap
    while d >= SUBLANE:
        if B % d == 0:
            return d, B                  # divides exactly -> no host-side pad
        d -= SUBLANE
    # TODO(synk): handle the ragged last tile in-kernel instead of padding
    # (only reached when no multiple-of-8 divisor of B fits under block_b).
    tb = max(SUBLANE, min(block_b, _round_up(pl.cdiv(B, 2), SUBLANE)))
    return tb, _round_up(B, tb)


@functools.partial(jax.jit, static_argnames=("block_b",))
def simple_mlp_forward(x, prepared, block_b: int = 1024):
    """x: [B, input_size] float32. prepared: output of prepare_params()."""
    weights = prepared["weights"]
    biases = prepared["biases"]
    num_layers = len(weights)

    B, in_dim = x.shape
    out_dim = weights[-1].shape[1]

    tb, b_pad = _pick_batch_tile(B, block_b)
    if b_pad != B:
        x = jnp.pad(x, ((0, b_pad - B), (0, 0)))

    grid = (b_pad // tb,)

    # x tiled over the batch (double-buffered by Pallas); weights/biases use a
    # constant index_map so they stay VMEM-resident across grid steps.
    in_specs = [pl.BlockSpec((tb, in_dim), lambda i: (i, 0))]
    operands = [x]
    flops = 0
    param_bytes = 0
    for w, b in zip(weights, biases):
        in_specs.append(pl.BlockSpec(w.shape, lambda i: (0, 0)))
        in_specs.append(pl.BlockSpec((1, b.shape[1]), lambda i: (0, 0)))
        operands += [w, b]
        flops += 2 * b_pad * w.shape[0] * w.shape[1]
        param_bytes += 4 * (w.size + b.size)

    cost = pl.CostEstimate(
        flops=flops,
        transcendentals=0,
        bytes_accessed=4 * b_pad * (in_dim + out_dim) + param_bytes,
    )

    out = pl.pallas_call(
        _make_mlp_kernel(num_layers),
        out_shape=jax.ShapeDtypeStruct((b_pad, out_dim), jnp.float32),
        grid=grid,
        in_specs=in_specs,
        # Output block spans the full (true) last dim: contiguous HBM writeback,
        # minimal output traffic, no post-kernel slice needed along features.
        out_specs=pl.BlockSpec((tb, out_dim), lambda i: (i, 0)),
        compiler_params=pltpu.CompilerParams(
            # Batch axis is embarrassingly parallel -> shard across TCs on v7x.
            dimension_semantics=("parallel",),
        ),
        cost_estimate=cost,
    )(*operands)

    return out if b_pad == B else out[:B]


def init_params(key, input_size, hidden_sizes, reconstruction=False):
    """Deterministic init mimicking torch.nn.Linear (uniform +/- 1/sqrt(fan_in)).
    Weights stored pre-transposed as [in, out]. Returns a list of (w, b)."""
    hidden_sizes = list(hidden_sizes)
    if reconstruction:
        hidden_sizes[-1] = hidden_sizes[-1] + input_size
    dims = [input_size] + hidden_sizes
    params = []
    for li in range(len(hidden_sizes)):
        key, kw, kb = jax.random.split(key, 3)
        fan_in, fan_out = dims[li], dims[li + 1]
        bound = 1.0 / float(jnp.sqrt(fan_in))
        params.append((
            jax.random.uniform(kw, (fan_in, fan_out), jnp.float32, -bound, bound),
            jax.random.uniform(kb, (fan_out,), jnp.float32, -bound, bound),
        ))
    return params


def reference_forward(x, params):
    """Pure-JAX reference matching the PyTorch module (unscaled params)."""
    h = x
    n = len(params)
    for li, (w, b) in enumerate(params):
        h = h @ w + b
        if li < n - 1:
            h = jnp.maximum(h, 0.0)
    return h.at[:, -1].multiply(10.0)


if __name__ == "__main__":
    key = jax.random.PRNGKey(0)

    # Config 1: SimpleMLP(input_size=64, hidden_sizes=[32, 16]) -> one hidden
    # ReLU layer + output layer, small batch (single full-extent block).
    k1, k2, key = jax.random.split(key, 3)
    B1, input_size = 8, 64
    hidden_sizes = [32, 16]
    x1 = jax.random.normal(k1, (B1, input_size), jnp.float32)
    params1 = init_params(k2, input_size, hidden_sizes)
    out1 = jax.block_until_ready(simple_mlp_forward(x1, prepare_params(params1)))
    ref1 = reference_forward(x1, params1)
    assert out1.shape == (B1, hidden_sizes[-1])
    assert jnp.allclose(out1, ref1, atol=1e-5, rtol=1e-5)

    # Config 2: module defaults SimpleMLP(64, [255]) -> single Linear, no ReLU.
    # Batch of 20 exercises the padded-remainder path (tb=16, grid=2).
    k3, k4, _ = jax.random.split(key, 3)
    B2 = 20
    x2 = jax.random.normal(k3, (B2, input_size), jnp.float32)
    params2 = init_params(k4, input_size, [255])
    out2 = jax.block_until_ready(simple_mlp_forward(x2, prepare_params(params2)))
    ref2 = reference_forward(x2, params2)
    assert out2.shape == (B2, 255)
    assert jnp.allclose(out2, ref2, atol=1e-5, rtol=1e-5)

    print("KERNEL_OK")
</pallas_src>

<mosaic_0001>
module attributes {stable_mosaic.version = 11 : i64} {
  func.func @kernel(%arg0: i32, %arg1: memref<8x64xf32, #tpu.memory_space<vmem>>, %arg2: memref<64x32xf32, #tpu.memory_space<vmem>>, %arg3: memref<1x32xf32, #tpu.memory_space<vmem>>, %arg4: memref<32x16xf32, #tpu.memory_space<vmem>>, %arg5: memref<1x16xf32, #tpu.memory_space<vmem>>, %arg6: memref<8x16xf32, #tpu.memory_space<vmem>>) attributes {dimension_semantics = [#tpu.dimension_semantics<parallel>], iteration_bounds = array<i64: 1>, scalar_prefetch = 0 : i64, scratch_operands = 0 : i64, tpu.core_type = #tpu.core_type<tc>, window_params = [{transform_indices = @transform_0, window_bounds = array<i64: 8, 64>}, {pipeline_mode = #tpu.pipeline_mode<synchronous>, transform_indices = @transform_1, window_bounds = array<i64: 64, 32>}, {pipeline_mode = #tpu.pipeline_mode<synchronous>, transform_indices = @transform_2, window_bounds = array<i64: 1, 32>}, {pipeline_mode = #tpu.pipeline_mode<synchronous>, transform_indices = @transform_3, window_bounds = array<i64: 32, 16>}, {pipeline_mode = #tpu.pipeline_mode<synchronous>, transform_indices = @transform_4, window_bounds = array<i64: 1, 16>}, {transform_indices = @transform_5, window_bounds = array<i64: 8, 16>}]} {
    %c0 = arith.constant 0 : index
    %c0_0 = arith.constant 0 : index
    %0 = vector.load %arg1[%c0, %c0_0] : memref<8x64xf32, #tpu.memory_space<vmem>>, vector<8x64xf32>
    %c0_1 = arith.constant 0 : index
    %c0_2 = arith.constant 0 : index
    %1 = vector.load %arg2[%c0_1, %c0_2] : memref<64x32xf32, #tpu.memory_space<vmem>>, vector<64x32xf32>
    %c0_3 = arith.constant 0 : index
    %c0_4 = arith.constant 0 : index
    %2 = vector.load %arg3[%c0_3, %c0_4] : memref<1x32xf32, #tpu.memory_space<vmem>>, vector<1x32xf32>
    %cst = arith.constant dense<0.000000e+00> : vector<8x32xf32>
    %3 = tpu.matmul %0, %1, %cst {dimension_numbers = #tpu.dot_dimension_numbers<[1], [0], [0], [1], [0, 0, 1, 1], [], []>} : vector<8x64xf32>, vector<64x32xf32>, vector<8x32xf32> -> vector<8x32xf32>
    %4 = vector.broadcast %2 : vector<1x32xf32> to vector<8x32xf32>
    %5 = arith.addf %3, %4 : vector<8x32xf32>
    %cst_5 = arith.constant 0.000000e+00 : f32
    %6 = vector.broadcast %cst_5 : f32 to vector<8x32xf32>
    %7 = arith.maximumf %5, %6 : vector<8x32xf32>
    %c0_6 = arith.constant 0 : index
    %c0_7 = arith.constant 0 : index
    %8 = vector.load %arg4[%c0_6, %c0_7] : memref<32x16xf32, #tpu.memory_space<vmem>>, vector<32x16xf32>
    %c0_8 = arith.constant 0 : index
    %c0_9 = arith.constant 0 : index
    %9 = vector.load %arg5[%c0_8, %c0_9] : memref<1x16xf32, #tpu.memory_space<vmem>>, vector<1x16xf32>
    %cst_10 = arith.constant dense<0.000000e+00> : vector<8x16xf32>
    %10 = tpu.matmul %7, %8, %cst_10 {dimension_numbers = #tpu.dot_dimension_numbers<[1], [0], [0], [1], [0, 0, 1, 1], [], []>} : vector<8x32xf32>, vector<32x16xf32>, vector<8x16xf32> -> vector<8x16xf32>
    %11 = vector.broadcast %9 : vector<1x16xf32> to vector<8x16xf32>
    %12 = arith.addf %10, %11 : vector<8x16xf32>
    %c0_11 = arith.constant 0 : index
    %c0_12 = arith.constant 0 : index
    %13 = vector.load %arg6[%c0_11, %c0_12] : memref<8x16xf32, #tpu.memory_space<vmem>>, vector<8x16xf32>
    tpu.vector_store %arg6[%c0_11, %c0_12], %12 {strides = array<i32>} : memref<8x16xf32, #tpu.memory_space<vmem>>, vector<8x16xf32>,
    return
  }
  func.func @transform_0(%arg0: i32) -> (i32, i32) {
    %c0_i32 = arith.constant 0 : i32
    %c0_i32_0 = arith.constant 0 : i32
    return %arg0, %c0_i32 : i32, i32
  }
  func.func @transform_1(%arg0: i32) -> (i32, i32) {
    %c0_i32 = arith.constant 0 : i32
    %c0_i32_0 = arith.constant 0 : i32
    %c0_i32_1 = arith.constant 0 : i32
    return %c0_i32, %c0_i32_0 : i32, i32
  }
  func.func @transform_2(%arg0: i32) -> (i32, i32) {
    %c0_i32 = arith.constant 0 : i32
    %c0_i32_0 = arith.constant 0 : i32
    %c0_i32_1 = arith.constant 0 : i32
    return %c0_i32, %c0_i32_0 : i32, i32
  }
  func.func @transform_3(%arg0: i32) -> (i32, i32) {
    %c0_i32 = arith.constant 0 : i32
    %c0_i32_0 = arith.constant 0 : i32
    %c0_i32_1 = arith.constant 0 : i32
    return %c0_i32, %c0_i32_0 : i32, i32
  }
  func.func @transform_4(%arg0: i32) -> (i32, i32) {
    %c0_i32 = arith.constant 0 : i32
    %c0_i32_0 = arith.constant 0 : i32
    %c0_i32_1 = arith.constant 0 : i32
    return %c0_i32, %c0_i32_0 : i32, i32
  }
  func.func @transform_5(%arg0: i32) -> (i32, i32) {
    %c0_i32 = arith.constant 0 : i32
    %c0_i32_0 = arith.constant 0 : i32
    return %arg0, %c0_i32 : i32, i32
  }
}

</mosaic_0001>

<llo_original>
// kernel: simple_mlp_forward.1
$region0: #{simple_mlp_forward.1}
  #allocation0 [shape = 'u32[]', space=smem, size = 0x4, offset = 0x4, fixed_abs, tag = 'smem constant byte address 0x4 - core index']
  #allocation1 [shape = 'u32[144,128]{1,0:T(1,128)}', space=vmem, size = 0x12000, scoped, tag = 'internal scratch']
  %s0 = inlined_call_operand.vmem [shape: f32[8,64], index: 0, kind: input, shape index: {}]
  %s1 = inlined_call_operand.vmem [shape: f32[64,32], index: 1, kind: input, shape index: {}]
  %s2 = inlined_call_operand.vmem [shape: f32[1,32], index: 2, kind: input, shape index: {}]
  %s3 = inlined_call_operand.vmem [shape: f32[32,16], index: 3, kind: input, shape index: {}]
  %s4 = inlined_call_operand.vmem [shape: f32[1,16], index: 4, kind: input, shape index: {}]
  %s5 = inlined_call_operand.hbm [shape: f32[8,16], index: 5, kind: output, shape index: {}]
  %s6 = sld [smem:[#allocation0]]
  $region30: #{simple_mlp_forward.1} parent=0
    _
  %s8 = ssub.s32 1, %s6
  %s9 = scalar_select 0, %s8, %s6
  $region1: #{simple_mlp_forward.1} parent=0
    #allocation2 [shape = 'u8[4096]{0}', space=vmem, size = 0x1000, scoped, tag = 'output window, operand 0, single buffered']
    #allocation3 [shape = 's32[1]{0}', space=sflag, size = 0x4, scoped, tag = 'scoped memory for simple_mlp_forward.1']
    %10 = vsyncpa [#allocation3], 0
    // Predicated region
    $region2: #{simple_mlp_forward.1} parent=1 // pred_check
      _
    $region3: #{simple_mlp_forward.1} parent=1 // pred_check_branch
      %12 = sbr.rel (0) target = $region5
    $region4: #{simple_mlp_forward.1} parent=1 // pred_region
      _
    $region5: #{simple_mlp_forward.1} parent=1 // pred_fallthru
      _
    // Predicated region
    $region6: #{simple_mlp_forward.1} parent=1 // pred_check
      _
    $region7: #{simple_mlp_forward.1} parent=1 // pred_check_branch
      %14 = sbr.rel (0) target = $region9
    $region8: #{simple_mlp_forward.1} parent=1 // pred_region
      _
    $region9: #{simple_mlp_forward.1} parent=1 // pred_fallthru
      _
    // Predicated region
    $region10: #{simple_mlp_forward.1} parent=1 // pred_check
      _
    $region11: #{simple_mlp_forward.1} parent=1 // pred_check_branch
      %16 = sbr.rel (0) target = $region13
    $region12: #{simple_mlp_forward.1} parent=1 // pred_region
      _
    $region13: #{simple_mlp_forward.1} parent=1 // pred_fallthru
      _
    // Predicated region
    $region14: #{simple_mlp_forward.1} parent=1 // pred_check
      _
    $region15: #{simple_mlp_forward.1} parent=1 // pred_check_branch
      %18 = sbr.rel (0) target = $region17
    $region16: #{simple_mlp_forward.1} parent=1 // pred_region
      _
    $region17: #{simple_mlp_forward.1} parent=1 // pred_fallthru
      _
    // Predicated region
    $region18: #{simple_mlp_forward.1} parent=1 // pred_check
      _
    $region19: #{simple_mlp_forward.1} parent=1 // pred_check_branch
      %20 = sbr.rel (0) target = $region21
    $region20: #{simple_mlp_forward.1} parent=1 // pred_region
      _
    $region21: #{simple_mlp_forward.1} parent=1 // pred_fallthru
      _
    %v21 = vld [vmem:[%s0] sm:$0xff]
    %v22 = vld [vmem:[%s1] sm:$0xff]
    %v23 = vld [vmem:[%s1 + $0x8] sm:$0xff]
    %v24 = vld [vmem:[%s1 + $0x10] sm:$0xff]
    %v25 = vld [vmem:[%s1 + $0x18] sm:$0xff]
    %v26 = vld [vmem:[%s1 + $0x20] sm:$0xff]
    %v27 = vld [vmem:[%s1 + $0x28] sm:$0xff]
    %v28 = vld [vmem:[%s1 + $0x30] sm:$0xff]
    %v29 = vld [vmem:[%s1 + $0x38] sm:$0xff]
    %v30 = vld [vmem:[%s2] sm:$0x1]
    %v32 = vlaneseq
    %v33 = vshrl.u32 %v32, 7
    %v34 = vsub.s32 0, %v33
    %v35 = vrot.slane %v30, %v34
    %vm37 = vcmask 523264
    %v39 = vsel %vm37, %v21, 0
    %41 = vmatprep.subr.mxu0 0.0
    %42 = vmatpush1.msra.mxu0 %v22
    %43 = vmatprep.subr.mxu0 0.0
    %44 = vmatpush1.msra.mxu0 %v23
    %45 = vmatprep.subr.mxu0 0.0
    %46 = vmatpush1.msra.mxu0 %v24
    %47 = vmatprep.subr.mxu0 0.0
    %48 = vmatpush1.msra.mxu0 %v25
    %49 = vmatprep.subr.mxu0 0.0
    %50 = vmatpush1.msra.mxu0 %v26
    %51 = vmatprep.subr.mxu0 0.0
    %52 = vmatpush1.msra.mxu0 %v27
    %53 = vmatprep.subr.mxu0 0.0
    %54 = vmatpush1.msra.mxu0 %v28
    %55 = vmatprep.subr.mxu0 0.0
    %56 = vmatpush1.msra.mxu0 %v29
    %57 = vmatprep.subr.mxu0 0.0
    %58 = vmatpush1.msra.mxu0 0.0
    %59 = vmatprep.subr.mxu0 0.0
    %60 = vmatpush1.msra.mxu0 0.0
    %61 = vmatprep.subr.mxu0 0.0
    %62 = vmatpush1.msra.mxu0 0.0
    %63 = vmatprep.subr.mxu0 0.0
    %64 = vmatpush1.msra.mxu0 0.0
    %65 = vmatprep.subr.mxu0 0.0
    %66 = vmatpush1.msra.mxu0 0.0
    %67 = vmatprep.subr.mxu0 0.0
    %68 = vmatpush1.msra.mxu0 0.0
    %69 = vmatprep.subr.mxu0 0.0
    %70 = vmatpush1.msra.mxu0 0.0
    %71 = vmatprep.subr.mxu0 0.0
    %72 = vmatpush1.msra.mxu0 0.0
    %73 = vmatprep.subr.mxu0 0.0
    %74 = vmatpush1.msra.mxu0 0.0
    %75 = vmatprep.subr.mxu0 0.0
    %76 = vmatpush1.msra.mxu0 0.0
    %77 = vmatprep.subr.mxu0 0.0
    %78 = vmatpush1.msra.mxu0 0.0
    %79 = vmatprep.subr.mxu0 0.0
    %80 = vmatpush1.msra.mxu0 0.0
    %81 = vmatprep.subr.mxu0 0.0
    %82 = vmatpush1.msra.mxu0 0.0
    %83 = vmatprep.subr.mxu0 0.0
    %84 = vmatpush1.msra.mxu0 0.0
    %85 = vmatprep.subr.mxu0 0.0
    %86 = vmatpush1.msra.mxu0 0.0
    %87 = vmatprep.subr.mxu0 0.0
    %88 = vmatpush1.msra.mxu0 0.0
    %89 = vmatprep.subr.mxu0 0.0
    %90 = vmatpush1.msra.mxu0 0.0
    %91 = vmatprep.subr.mxu0 0.0
    %92 = vmatpush1.msra.mxu0 0.0
    %93 = vmatprep.subr.mxu0 0.0
    %94 = vmatpush1.msra.mxu0 0.0
    %95 = vmatprep.subr.mxu0 0.0
    %96 = vmatpush1.msra.mxu0 0.0
    %97 = vmatprep.subr.mxu0 0.0
    %98 = vmatpush1.msra.mxu0 0.0
    %99 = vmatprep.subr.mxu0 0.0
    %100 = vmatpush1.msra.mxu0 0.0
    %101 = vmatprep.subr.mxu0 0.0
    %102 = vmatpush1.msra.mxu0 0.0
    %103 = vmatprep.subr.mxu0 0.0
    %104 = vmatpush1.msra.mxu0 0.0
    %105 = vmatprep.mubr.f32.mxu0 0.0
    %106 = vmatmul.mubr.f32.gmra.mrb[0].mxu0 %v39
    %v107 = vpop.f32.mrb[0].mxu0
    %v108 = vadd.f32 %v35, %v107
    %v109 = vpop.f32.mrb[0].mxu0
    %110 = vdwg.mxu0
    %v111 = vmax.f32 %v108, 0.0
    %v112 = vld [vmem:[%s3] sm:$0xff]
    %v113 = vld [vmem:[%s3 + $0x8] sm:$0xff]
    %v114 = vld [vmem:[%s3 + $0x10] sm:$0xff]
    %v115 = vld [vmem:[%s3 + $0x18] sm:$0xff]
    %v116 = vld [vmem:[%s4] sm:$0x1]
    %v118 = vlaneseq
    %v119 = vshrl.u32 %v118, 7
    %v120 = vsub.s32 0, %v119
    %v121 = vrot.slane %v116, %v120
    %vm123 = vcmask 261120
    %v125 = vsel %vm123, %v111, 0
    %127 = vmatprep.subr.mxu0 0.0
    %128 = vmatpush1.msra.mxu0 %v112
    %129 = vmatprep.subr.mxu0 0.0
    %130 = vmatpush1.msra.mxu0 %v113
    %131 = vmatprep.subr.mxu0 0.0
    %132 = vmatpush1.msra.mxu0 %v114
    %133 = vmatprep.subr.mxu0 0.0
    %134 = vmatpush1.msra.mxu0 %v115
    %135 = vmatprep.subr.mxu0 0.0
    %136 = vmatpush1.msra.mxu0 0.0
    %137 = vmatprep.subr.mxu0 0.0
    %138 = vmatpush1.msra.mxu0 0.0
    %139 = vmatprep.subr.mxu0 0.0
    %140 = vmatpush1.msra.mxu0 0.0
    %141 = vmatprep.subr.mxu0 0.0
    %142 = vmatpush1.msra.mxu0 0.0
    %143 = vmatprep.subr.mxu0 0.0
    %144 = vmatpush1.msra.mxu0 0.0
    %145 = vmatprep.subr.mxu0 0.0
    %146 = vmatpush1.msra.mxu0 0.0
    %147 = vmatprep.subr.mxu0 0.0
    %148 = vmatpush1.msra.mxu0 0.0
    %149 = vmatprep.subr.mxu0 0.0
    %150 = vmatpush1.msra.mxu0 0.0
    %151 = vmatprep.subr.mxu0 0.0
    %152 = vmatpush1.msra.mxu0 0.0
    %153 = vmatprep.subr.mxu0 0.0
    %154 = vmatpush1.msra.mxu0 0.0
    %155 = vmatprep.subr.mxu0 0.0
    %156 = vmatpush1.msra.mxu0 0.0
    %157 = vmatprep.subr.mxu0 0.0
    %158 = vmatpush1.msra.mxu0 0.0
    %159 = vmatprep.subr.mxu0 0.0
    %160 = vmatpush1.msra.mxu0 0.0
    %161 = vmatprep.subr.mxu0 0.0
    %162 = vmatpush1.msra.mxu0 0.0
    %163 = vmatprep.subr.mxu0 0.0
    %164 = vmatpush1.msra.mxu0 0.0
    %165 = vmatprep.subr.mxu0 0.0
    %166 = vmatpush1.msra.mxu0 0.0
    %167 = vmatprep.subr.mxu0 0.0
    %168 = vmatpush1.msra.mxu0 0.0
    %169 = vmatprep.subr.mxu0 0.0
    %170 = vmatpush1.msra.mxu0 0.0
    %171 = vmatprep.subr.mxu0 0.0
    %172 = vmatpush1.msra.mxu0 0.0
    %173 = vmatprep.subr.mxu0 0.0
    %174 = vmatpush1.msra.mxu0 0.0
    %175 = vmatprep.subr.mxu0 0.0
    %176 = vmatpush1.msra.mxu0 0.0
    %177 = vmatprep.subr.mxu0 0.0
    %178 = vmatpush1.msra.mxu0 0.0
    %179 = vmatprep.subr.mxu0 0.0
    %180 = vmatpush1.msra.mxu0 0.0
    %181 = vmatprep.subr.mxu0 0.0
    %182 = vmatpush1.msra.mxu0 0.0
    %183 = vmatprep.subr.mxu0 0.0
    %184 = vmatpush1.msra.mxu0 0.0
    %185 = vmatprep.subr.mxu0 0.0
    %186 = vmatpush1.msra.mxu0 0.0
    %187 = vmatprep.subr.mxu0 0.0
    %188 = vmatpush1.msra.mxu0 0.0
    %189 = vmatprep.subr.mxu0 0.0
    %190 = vmatpush1.msra.mxu0 0.0
    %191 = vmatprep.mubr.f32.mxu0 0.0
    %192 = vmatmul.mubr.f32.gmra.mrb[0].mxu0 %v125
    %v193 = vpop.f32.mrb[0].mxu0
    %v194 = vadd.f32 %v121, %v193
    %v195 = vpop.f32.mrb[0].mxu0
    %196 = vdwg.mxu0
    %vm197 = vcmask 130048
    %198 = vst.msk [vmem:[#allocation2] sm:$0xff] %vm197, %v194
    // Predicated region
    $region22: #{simple_mlp_forward.1} parent=1 // pred_check
      _
    $region23: #{simple_mlp_forward.1} parent=1 // pred_check_branch
      %200 = sbr.rel (0) target = $region25
    $region24: #{simple_mlp_forward.1} parent=1 // pred_region
      %s202 = ssub.s32 128, 128
      %203 = vsyncadd [#allocation3], %s202
      %s205 = sshll.u32 [#allocation2], 4
      %s206 = int_to_ptr.vmem [resolvable:$true] %s205
      %208 = dma.vmem_to_hbm [thread:$0]  %s206, 128, %s5, [#allocation3]
    $region25: #{simple_mlp_forward.1} parent=1 // pred_fallthru
      _
    // Predicated region
    $region26: #{simple_mlp_forward.1} parent=1 // pred_check
      _
    $region27: #{simple_mlp_forward.1} parent=1 // pred_check_branch
      %210 = sbr.rel (0) target = $region29
    $region28: #{simple_mlp_forward.1} parent=1 // pred_region
      %211 = dma.done [#allocation3], 128
    $region29: #{simple_mlp_forward.1} parent=1 // pred_fallthru
      _
    %212 = vsyncpa [#allocation3], 1

</llo_original>
